<compile_context>
chip_gen: v5e
topology: v5e:2x2
jax: 0.10.0
libtpu: 0.0.40
codegen_flags: <defaults>
</compile_context>

<pallas_src>
import numpy as np
import jax
import jax.numpy as jnp
from jax.experimental import pallas as pl
from jax.experimental.pallas import tpu as pltpu


def _out_len(L, k, s):
    return (L - k) // s + 1


def _round_up(x, m):
    return ((x + m - 1) // m) * m


# ---------------------------------------------------------------------------
# Kernel: one (C_out, K) @ (K, TILE_M) matmul + bias + ReLU per grid step.
# All branch / BN structure is pre-folded into w_ref / b_ref by the wrapper.
# ---------------------------------------------------------------------------
def _fused_matmul_bias_relu_kernel(w_ref, x_ref, b_ref, o_ref):
    acc = jnp.dot(w_ref[...], x_ref[...], preferred_element_type=jnp.float32)
    o_ref[...] = jnp.maximum(acc + b_ref[...], 0.0).astype(o_ref.dtype)


def _launch_fused(w_stack, xcol, bias, *, tile_m):
    """w_stack (C_out, K), xcol (K, M_pad), bias (C_out, 1) -> (C_out, M_pad) f32."""
    C_out, K = w_stack.shape
    _, M_pad = xcol.shape
    assert M_pad % tile_m == 0 and tile_m % 128 == 0
    grid = (M_pad // tile_m,)
    return pl.pallas_call(
        _fused_matmul_bias_relu_kernel,
        out_shape=jax.ShapeDtypeStruct((C_out, M_pad), jnp.float32),
        grid=grid,
        in_specs=[
            pl.BlockSpec((C_out, K), lambda m: (0, 0)),      # resident stacked weights
            pl.BlockSpec((K, tile_m), lambda m: (0, m)),     # lane-dense im2col tile
            pl.BlockSpec((C_out, 1), lambda m: (0, 0)),      # resident bias
        ],
        out_specs=pl.BlockSpec((C_out, tile_m), lambda m: (0, m)),
        compiler_params=pltpu.CompilerParams(
            dimension_semantics=("parallel",),               # shards across v7x's 2 TCs
            vmem_limit_bytes=32 * 1024 * 1024,
        ),
    )(w_stack, xcol, bias)


# ---------------------------------------------------------------------------
# Wrapper-side layout plumbing (im2col, BN folding, branch stacking)
# ---------------------------------------------------------------------------
def _build_columns(x, branch_positions, compute_dtype):
    """x: (N, C_in, L).  branch_positions: list of static (out_L,) index arrays.
    Returns lane-dense (num_branches*C_in, N*out_L) in compute_dtype."""
    N, C_in, L = x.shape
    xb = x.astype(compute_dtype)
    parts = [jnp.take(xb, jnp.asarray(pos, jnp.int32), axis=2)   # (N, C_in, out_L)
             for pos in branch_positions]
    cols = jnp.concatenate(parts, axis=1)                        # (N, K, out_L)
    K, out_L = cols.shape[1], cols.shape[2]
    return jnp.transpose(cols, (1, 0, 2)).reshape(K, N * out_L)  # n-major, j-minor


def _pad_lanes(xcol, tile_m):
    K, M = xcol.shape
    tile = min(_round_up(tile_m, 128), _round_up(M, 128))
    M_pad = _round_up(M, tile)
    if M_pad != M:
        xcol = jnp.pad(xcol, ((0, 0), (0, M_pad - M)))
    return xcol, tile, M


def _fold_bn(bn):
    gamma, beta, mean, var, eps = bn
    s = (gamma / jnp.sqrt(var + eps)).astype(jnp.float32)
    b = (beta - mean * s).astype(jnp.float32)
    return s, b


def repvgg_block_1d_train(x, w3, bn3, w1, bn1, bn_id, *, stride=1,
                          compute_dtype=jnp.bfloat16, tile_m=512):
    """deploy=False forward.  x: (N, C_in, L).  Returns (N, C_out, out_L) f32."""
    N, C_in, L = x.shape
    C_out = w3.shape[0]
    L3 = _out_len(L, 3, stride)
    L1 = _out_len(L, 1, stride)
    # Same broadcast rule PyTorch applies to rbr_conv(x) + rbr_1x1(x)
    out_L = int(np.broadcast_shapes((L3,), (L1,))[0])

    has_id = bn_id is not None
    if has_id:
        if not (stride == 1 and C_in == C_out):
            raise ValueError("rbr_identity only exists when C_in == C_out and stride == 1")
        # in-place `out += identity(x)` cannot grow out's length
        if int(np.broadcast_shapes((out_L,), (L,))[0]) != out_L:
            raise ValueError("identity branch length does not broadcast into the output")

    # Static source positions per output index (clamp = length broadcasting).
    j = np.arange(out_L)
    j3 = np.minimum(j, L3 - 1) * stride
    j1 = np.minimum(j, L1 - 1) * stride
    positions = [j3 + 0, j3 + 1, j3 + 2, j1]
    if has_id:
        positions.append(np.minimum(j, L - 1))

    # Fold eval-mode BN into weights / one bias, stack all branches (RepVGG reparam).
    s3, b3 = _fold_bn(bn3)
    s1, b1 = _fold_bn(bn1)
    w3f = w3.astype(jnp.float32) * s3[:, None, None]             # (C_out, C_in, 3)
    w1f = w1.astype(jnp.float32)[:, :, 0] * s1[:, None]          # (C_out, C_in)
    blocks = [w3f[:, :, 0], w3f[:, :, 1], w3f[:, :, 2], w1f]
    bias = b3 + b1
    if has_id:
        sid, bid = _fold_bn(bn_id)
        blocks.append(jnp.diag(sid))
        bias = bias + bid
    w_stack = jnp.concatenate(blocks, axis=1).astype(compute_dtype)   # (C_out, K)
    bias = bias.reshape(C_out, 1).astype(jnp.float32)

    xcol = _build_columns(x, positions, compute_dtype)           # (K, N*out_L)
    xcol, tile, M = _pad_lanes(xcol, tile_m)

    y = _launch_fused(w_stack, xcol, bias, tile_m=tile)          # (C_out, M_pad)
    y = y[:, :M].reshape(C_out, N, out_L)
    return jnp.transpose(y, (1, 0, 2))                           # (N, C_out, out_L)


def repvgg_block_1d_deploy(x, w, b, *, stride=1, compute_dtype=jnp.bfloat16, tile_m=512):
    """deploy=True forward.  x: (N, C_in, L), w: (C_out, C_in, 3), b: (C_out,)."""
    N, C_in, L = x.shape
    C_out = w.shape[0]
    L3 = _out_len(L, 3, stride)

    base = np.arange(L3) * stride
    positions = [base + k for k in range(3)]

    wf = w.astype(jnp.float32)
    w_stack = jnp.concatenate([wf[:, :, 0], wf[:, :, 1], wf[:, :, 2]],
                              axis=1).astype(compute_dtype)       # (C_out, 3*C_in)
    bias = b.reshape(C_out, 1).astype(jnp.float32)

    xcol = _build_columns(x, positions, compute_dtype)            # (3*C_in, N*L3)
    xcol, tile, M = _pad_lanes(xcol, tile_m)

    y = _launch_fused(w_stack, xcol, bias, tile_m=tile)           # (C_out, M_pad)
    y = y[:, :M].reshape(C_out, N, L3)
    return jnp.transpose(y, (1, 0, 2))                            # (N, C_out, L3)


# ---------------------------------------------------------------------------
# Pure-JAX references (correctness check)
# ---------------------------------------------------------------------------
def _ref_conv1d(x, w, stride):
    return jax.lax.conv_general_dilated(
        x, w, window_strides=(stride,), padding="VALID",
        dimension_numbers=("NCH", "OIH", "NCH"))


def _ref_bn(y, bn):
    g, b, m, v, eps = bn
    return (y - m[None, :, None]) / jnp.sqrt(v[None, :, None] + eps) \
        * g[None, :, None] + b[None, :, None]


def ref_train(x, w3, bn3, w1, bn1, bn_id, stride):
    y3 = _ref_bn(_ref_conv1d(x, w3, stride), bn3)
    y1 = _ref_bn(_ref_conv1d(x, w1, stride), bn1)
    out = y3 + y1
    if bn_id is not None:
        out = out + _ref_bn(x, bn_id)
    return jnp.maximum(out, 0.0)


def ref_deploy(x, w, b, stride):
    return jnp.maximum(_ref_conv1d(x, w, stride) + b[None, :, None], 0.0)


# ---------------------------------------------------------------------------
if __name__ == "__main__":
    key = jax.random.PRNGKey(0)
    ks = jax.random.split(key, 10)

    def make_bn(k, ch):
        k1, k2, k3, k4 = jax.random.split(k, 4)
        gamma = 1.0 + 0.1 * jax.random.normal(k1, (ch,), jnp.float32)
        beta = 0.1 * jax.random.normal(k2, (ch,), jnp.float32)
        mean = 0.1 * jax.random.normal(k3, (ch,), jnp.float32)
        var = jnp.abs(jax.random.normal(k4, (ch,), jnp.float32)) + 0.5
        return (gamma, beta, mean, var, 1e-5)

    # --- deploy=False: padding=0 => branches only broadcast when L == 3 (stride 1) ---
    N, C, L, stride = 2, 8, 3, 1
    x = jax.random.normal(ks[0], (N, C, L), jnp.float32)
    w3 = 0.1 * jax.random.normal(ks[1], (C, C, 3), jnp.float32)
    w1 = 0.1 * jax.random.normal(ks[2], (C, C, 1), jnp.float32)
    bn3, bn1, bn_id = make_bn(ks[3], C), make_bn(ks[4], C), make_bn(ks[5], C)

    ref = ref_train(x, w3, bn3, w1, bn1, bn_id, stride)
    # bf16 fast path (default): loose tolerance, documented — bf16 inputs/weights.
    out_bf16 = jax.block_until_ready(
        repvgg_block_1d_train(x, w3, bn3, w1, bn1, bn_id, stride=stride))
    np.testing.assert_allclose(np.asarray(out_bf16), np.asarray(ref),
                               rtol=5e-2, atol=5e-2)
    # f32 path: tight tolerance sanity check of the folded-reparam math.
    out_f32 = jax.block_until_ready(
        repvgg_block_1d_train(x, w3, bn3, w1, bn1, bn_id, stride=stride,
                              compute_dtype=jnp.float32))
    np.testing.assert_allclose(np.asarray(out_f32), np.asarray(ref),
                               rtol=1e-4, atol=1e-4)

    # --- deploy=True branch: single 3-tap conv + bias + ReLU ---
    Ld = 130
    xd = jax.random.normal(ks[6], (N, C, Ld), jnp.float32)
    wd = 0.1 * jax.random.normal(ks[7], (C, C, 3), jnp.float32)
    bd = 0.1 * jax.random.normal(ks[8], (C,), jnp.float32)
    refd = ref_deploy(xd, wd, bd, 1)
    outd_bf16 = jax.block_until_ready(repvgg_block_1d_deploy(xd, wd, bd, stride=1))
    np.testing.assert_allclose(np.asarray(outd_bf16), np.asarray(refd),
                               rtol=5e-2, atol=5e-2)
    outd_f32 = jax.block_until_ready(
        repvgg_block_1d_deploy(xd, wd, bd, stride=1, compute_dtype=jnp.float32))
    np.testing.assert_allclose(np.asarray(outd_f32), np.asarray(refd),
                               rtol=1e-4, atol=1e-4)

    print("KERNEL_OK")
</pallas_src>

<mosaic_0001>
module attributes {stable_mosaic.version = 11 : i64} {
  func.func @_fused_matmul_bias_relu_kernel(%arg0: i32, %arg1: memref<8x40xbf16, #tpu.memory_space<vmem>>, %arg2: memref<40x128xbf16, #tpu.memory_space<vmem>>, %arg3: memref<8x1xf32, #tpu.memory_space<vmem>>, %arg4: memref<8x128xf32, #tpu.memory_space<vmem>>) attributes {dimension_semantics = [#tpu.dimension_semantics<parallel>], iteration_bounds = array<i64: 1>, scalar_prefetch = 0 : i64, scratch_operands = 0 : i64, tpu.core_type = #tpu.core_type<tc>, window_params = [{pipeline_mode = #tpu.pipeline_mode<synchronous>, transform_indices = @transform_0, window_bounds = array<i64: 8, 40>}, {transform_indices = @transform_1, window_bounds = array<i64: 40, 128>}, {pipeline_mode = #tpu.pipeline_mode<synchronous>, transform_indices = @transform_2, window_bounds = array<i64: 8, 1>}, {transform_indices = @transform_3, window_bounds = array<i64: 8, 128>}]} {
    %c0 = arith.constant 0 : index
    %c0_0 = arith.constant 0 : index
    %0 = vector.load %arg1[%c0, %c0_0] : memref<8x40xbf16, #tpu.memory_space<vmem>>, vector<8x40xbf16>
    %c0_1 = arith.constant 0 : index
    %c0_2 = arith.constant 0 : index
    %1 = vector.load %arg2[%c0_1, %c0_2] : memref<40x128xbf16, #tpu.memory_space<vmem>>, vector<40x128xbf16>
    %cst = arith.constant dense<0.000000e+00> : vector<8x128xf32>
    %2 = tpu.matmul %0, %1, %cst {dimension_numbers = #tpu.dot_dimension_numbers<[1], [0], [0], [1], [0, 0, 1, 1], [], []>} : vector<8x40xbf16>, vector<40x128xbf16>, vector<8x128xf32> -> vector<8x128xf32>
    %c0_3 = arith.constant 0 : index
    %c0_4 = arith.constant 0 : index
    %3 = vector.load %arg3[%c0_3, %c0_4] : memref<8x1xf32, #tpu.memory_space<vmem>>, vector<8x1xf32>
    %4 = vector.broadcast %3 : vector<8x1xf32> to vector<8x128xf32>
    %5 = arith.addf %2, %4 : vector<8x128xf32>
    %cst_5 = arith.constant 0.000000e+00 : f32
    %6 = vector.broadcast %cst_5 : f32 to vector<8x128xf32>
    %7 = arith.maximumf %5, %6 : vector<8x128xf32>
    %c0_6 = arith.constant 0 : index
    %c0_7 = arith.constant 0 : index
    %8 = vector.load %arg4[%c0_6, %c0_7] : memref<8x128xf32, #tpu.memory_space<vmem>>, vector<8x128xf32>
    tpu.vector_store %arg4[%c0_6, %c0_7], %7 {strides = array<i32>} : memref<8x128xf32, #tpu.memory_space<vmem>>, vector<8x128xf32>,
    return
  }
  func.func @transform_0(%arg0: i32) -> (i32, i32) {
    %c0_i32 = arith.constant 0 : i32
    %c0_i32_0 = arith.constant 0 : i32
    %c0_i32_1 = arith.constant 0 : i32
    return %c0_i32, %c0_i32_0 : i32, i32
  }
  func.func @transform_1(%arg0: i32) -> (i32, i32) {
    %c0_i32 = arith.constant 0 : i32
    %c0_i32_0 = arith.constant 0 : i32
    return %c0_i32, %arg0 : i32, i32
  }
  func.func @transform_2(%arg0: i32) -> (i32, i32) {
    %c0_i32 = arith.constant 0 : i32
    %c0_i32_0 = arith.constant 0 : i32
    %c0_i32_1 = arith.constant 0 : i32
    return %c0_i32, %c0_i32_0 : i32, i32
  }
  func.func @transform_3(%arg0: i32) -> (i32, i32) {
    %c0_i32 = arith.constant 0 : i32
    %c0_i32_0 = arith.constant 0 : i32
    return %c0_i32, %arg0 : i32, i32
  }
}

</mosaic_0001>

<llo_original>
// kernel: tpu_custom_call.1
$region0: #{tpu_custom_call.1}
  #allocation0 [shape = 'u32[]', space=smem, size = 0x4, offset = 0x4, fixed_abs, tag = 'smem constant byte address 0x4 - core index']
  #allocation1 [shape = 'u32[72,128]{1,0:T(1,128)}', space=vmem, size = 0x9000, scoped, tag = 'internal scratch']
  %s0 = inlined_call_operand.vmem [shape: bf16[8,40], index: 0, kind: input, shape index: {}]
  %s1 = inlined_call_operand.hbm [shape: bf16[40,128], index: 1, kind: input, shape index: {}]
  %s2 = inlined_call_operand.vmem [shape: f32[8,1], index: 2, kind: input, shape index: {}]
  %s3 = inlined_call_operand.hbm [shape: f32[8,128], index: 3, kind: output, shape index: {}]
  %s4 = sld [smem:[#allocation0]]
  $region26: #{tpu_custom_call.1} parent=0
    _
  %s6 = ssub.s32 1, %s4
  %s7 = scalar_select 0, %s6, %s4
  $region1: #{tpu_custom_call.1} parent=0
    #allocation2 [shape = 'u8[10240]{0}', space=vmem, size = 0x2800, scoped, tag = 'input window, operand 1, single buffered']
    #allocation3 [shape = 's32[1]{0}', space=sflag, size = 0x4, scoped, tag = 'scoped memory for tpu_custom_call.1']
    #allocation4 [shape = 's32[1]{0}', space=sflag, size = 0x4, scoped, tag = 'scoped memory for tpu_custom_call.1']
    #allocation5 [shape = 'u8[4096]{0}', space=vmem, size = 0x1000, scoped, tag = 'output window, operand 0, single buffered']
    %8 = vsyncpa [#allocation3], 0
    %9 = vsyncpa [#allocation4], 0
    // Predicated region
    $region2: #{tpu_custom_call.1} parent=1 // pred_check
      _
    $region3: #{tpu_custom_call.1} parent=1 // pred_check_branch
      %11 = sbr.rel (0) target = $region5
    $region4: #{tpu_custom_call.1} parent=1 // pred_region
      _
    $region5: #{tpu_custom_call.1} parent=1 // pred_fallthru
      _
    // Predicated region
    $region6: #{tpu_custom_call.1} parent=1 // pred_check
      _
    $region7: #{tpu_custom_call.1} parent=1 // pred_check_branch
      %13 = sbr.rel (0) target = $region9
    $region8: #{tpu_custom_call.1} parent=1 // pred_region
      %15 = vsyncadd [#allocation3], 0
      %s16 = sshll.u32 %s1, 4
      %s17 = int_to_ptr.hbm [resolvable:$true] %s16
      %s18 = sshll.u32 [#allocation2], 4
      %s19 = int_to_ptr.vmem [resolvable:$true] %s18
      %24 = dma.hbm_to_vmem [thread:$0]  %s17, 320, %s19, [#allocation3], 64, 64, 4
    $region9: #{tpu_custom_call.1} parent=1 // pred_fallthru
      _
    // Predicated region
    $region10: #{tpu_custom_call.1} parent=1 // pred_check
      _
    $region11: #{tpu_custom_call.1} parent=1 // pred_check_branch
      %26 = sbr.rel (0) target = $region13
    $region12: #{tpu_custom_call.1} parent=1 // pred_region
      _
    $region13: #{tpu_custom_call.1} parent=1 // pred_fallthru
      _
    // Predicated region
    $region14: #{tpu_custom_call.1} parent=1 // pred_check
      _
    $region15: #{tpu_custom_call.1} parent=1 // pred_check_branch
      %28 = sbr.rel (0) target = $region17
    $region16: #{tpu_custom_call.1} parent=1 // pred_region
      %30 = dma.done [#allocation3], 320
    $region17: #{tpu_custom_call.1} parent=1 // pred_fallthru
      _
    %v32 = vld [vmem:[%s0] sm:$0xf]
    %v33 = vld [vmem:[#allocation2] sm:$0xf]
    %v34 = vld [vmem:[#allocation2 + $0x4] sm:$0xf]
    %v35 = vld [vmem:[#allocation2 + $0x8] sm:$0xf]
    %v36 = vld [vmem:[#allocation2 + $0xc] sm:$0xf]
    %v37 = vld [vmem:[#allocation2 + $0x10] sm:$0xf]
    %v38 = vld [vmem:[%s2] sm:$0xff]
    %40 = vset.pattern.permute.xlu0 0
    %41 = vperm.xlu0 %40, %v38
    %v42 = vpop.permute.xlu0 %41
    %v49 = vunpack.c.l.b16 %v33
    %v50 = vunpack.c.l.b16 %v34
    %v51 = vunpack.c.l.b16 %v35
    %v52 = vunpack.c.l.b16 %v36
    %v53 = vunpack.c.l.b16 %v37
    %v54 = vpack.c.b16 %v50, %v49
    %v55 = vpack.c.b16 %v52, %v51
    %v56 = vpack.c.b16 %v53, %v53
    %vm59 = vcmask 326656
    %v61 = vsel %vm59, %v32, 0
    %vm63 = vcmask 1043456
    %v65 = vsel %vm63, %v56, 0
    %67 = vmatpush.bf16.msra.mxu0 0
    %68 = vmatpush.bf16.msra.mxu0 0
    %69 = vmatpush.bf16.msra.mxu0 0
    %70 = vmatpush.bf16.msra.mxu0 0
    %71 = vmatpush.bf16.msra.mxu0 0
    %72 = vmatpush.bf16.msra.mxu0 %v65
    %73 = vmatpush.bf16.msra.mxu0 %v55
    %74 = vmatpush.bf16.msra.mxu0 %v54
    %75 = vmatmul.bf16.gmra.mxu0 %v61
    %v76 = vpop.f32.mrf.mxu0
    %v77 = vadd.f32 %v42, %v76
    %v78 = vpop.f32.mrf.mxu0
    %79 = vdwg.mxu0
    %v80 = vmax.f32 %v77, 0.0
    %81 = vst [vmem:[#allocation5] sm:$0xff] %v80
    // Predicated region
    $region18: #{tpu_custom_call.1} parent=1 // pred_check
      _
    $region19: #{tpu_custom_call.1} parent=1 // pred_check_branch
      %83 = sbr.rel (0) target = $region21
    $region20: #{tpu_custom_call.1} parent=1 // pred_region
      %85 = vsyncadd [#allocation4], 0
      %s87 = sshll.u32 [#allocation5], 4
      %s88 = int_to_ptr.vmem [resolvable:$true] %s87
      %s89 = sshll.u32 %s3, 4
      %s90 = int_to_ptr.hbm [resolvable:$true] %s89
      %92 = dma.vmem_to_hbm [thread:$0]  %s88, 128, %s90, [#allocation4]
    $region21: #{tpu_custom_call.1} parent=1 // pred_fallthru
      _
    // Predicated region
    $region22: #{tpu_custom_call.1} parent=1 // pred_check
      _
    $region23: #{tpu_custom_call.1} parent=1 // pred_check_branch
      %94 = sbr.rel (0) target = $region25
    $region24: #{tpu_custom_call.1} parent=1 // pred_region
      %96 = dma.done [#allocation4], 128
    $region25: #{tpu_custom_call.1} parent=1 // pred_fallthru
      _
    %97 = vsyncpa [#allocation3], 1
    %98 = vsyncpa [#allocation4], 1

</llo_original>
